<compile_context>
chip_gen: v6e
topology: v6e:2x2x1
jax: 0.10.0
libtpu: 0.0.40
codegen_flags: <defaults>
</compile_context>

<pallas_src>
import functools

import jax
import jax.numpy as jnp
from jax import lax
from jax.experimental import pallas as pl
from jax.experimental.pallas import tpu as pltpu


# ----------------------------------------------------------------------------
# Per-generation resource configuration
# ----------------------------------------------------------------------------
def _chip_config():
    """Resource budgets for the streaming pass (kernel B).

    tile_budget : target bytes for one x tile (double buffering of x + out
                  gives a ~4x footprint, plus the small mask tile)
    vmem_limit  : scoped-VMEM override for both pallas_calls (None = default)
    bm_dtype    : storage dtype of the block mask between kernels A and B
    """
    kind = ""
    try:
        kind = (jax.devices()[0].device_kind or "").lower()
    except Exception:
        pass
    if "v7" in kind or "7x" in kind:
        # v7x: 64 MiB physical VMEM/TC, 3.2 TB/s HBM -> bigger tiles to amortize
        # the ~0.35us per-step cost, but keep 4x tile + mask comfortably < 64 MiB.
        return dict(tile_budget=8 << 20, vmem_limit=48 << 20, bm_dtype=jnp.bfloat16)
    if "v6" in kind:
        # v6e: 128 MiB physical VMEM -> large tiles, raise the 32 MiB scoped default.
        return dict(tile_budget=16 << 20, vmem_limit=96 << 20, bm_dtype=jnp.bfloat16)
    if "v5 lite" in kind or "v5e" in kind or "v5lite" in kind:
        # v5e: scoped-VMEM default is only 16 MiB -> must raise it explicitly
        # (128 MiB physical). Keep the mask in f32 (no bf16 VALU on v5e).
        return dict(tile_budget=16 << 20, vmem_limit=96 << 20, bm_dtype=jnp.float32)
    # Unknown / older chips: stay under a 16 MiB conservative scoped default.
    return dict(tile_budget=2 << 20, vmem_limit=None, bm_dtype=jnp.float32)


# ----------------------------------------------------------------------------
# Kernel A: seed mask -> block mask (separable stride-1 max pool) + partial sum
# ----------------------------------------------------------------------------
def _blockmask_kernel(padded_ref, bm_ref, psum_ref, *, H, W, block_size):
    """Expand the zero-padded seed mask into the block mask for one N-tile.

    padded_ref : (n_t, H+2p, W+2p)  zero-padded Bernoulli seed mask (f32)
    bm_ref     : (n_t, H, W)        block mask (1 = keep, 0 = drop)
    psum_ref   : (1, 1, 1)          partial sum of the block mask for this tile
    """
    padded = padded_ref[...]
    # Separable stride-1 max pool. Zero padding is equivalent to -inf padding
    # for a {0,1} mask; 2*(k-1) shifted maxima instead of k**2 window reads.
    # The even-block_size crop ([:-1, :-1] in PyTorch) is implicit in the
    # window ranges.
    # TODO(synk): a pltpu.roll + boundary-mask variant on the UNPADDED mask
    # would avoid the unaligned-slice relayouts and the jnp.pad pass; kept
    # slice-based for lowering robustness (mask traffic is ~1/C of kernel B's).
    row = padded[:, :, 0:W]
    for dj in range(1, block_size):
        row = jnp.maximum(row, padded[:, :, dj:dj + W])
    pooled = row[:, 0:H, :]
    for di in range(1, block_size):
        pooled = jnp.maximum(pooled, row[:, di:di + H, :])
    bm = 1.0 - pooled                                   # f32
    bm_ref[...] = bm.astype(bm_ref.dtype)               # bf16 on v6e/v7x
    psum_ref[...] = jnp.sum(bm).reshape(1, 1, 1)        # f32 reduction


def _pick_n_tile(N, Hp, Wp, itemsize=4, budget=2 << 20):
    """Largest divisor of N whose padded-mask tile fits the budget. Prefer at
    least two tiles (when N > 1) so v7x's two TensorCores both get work."""
    per = Hp * Wp * itemsize
    cap = N // 2 if N > 1 else 1
    best = 1
    for d in range(1, N + 1):
        if N % d == 0 and d <= cap and d * per <= budget:
            best = d
    return best


# ----------------------------------------------------------------------------
# Kernel B: out = x * (block_mask * scale), lane-dense streaming pass
# ----------------------------------------------------------------------------
def _apply_kernel(scale_ref, x_ref, bm_ref, o_ref):
    """scale_ref: (1, 1)  x_ref/o_ref: (1, c_t, hw_t)  bm_ref: (1, 1, hw_t)."""
    # Fold the global scale into the small mask tile once (amortized over c_t
    # channels) -> a single multiply per x element, math in f32.
    bm_scaled = bm_ref[...].astype(jnp.float32) * scale_ref[...]
    o_ref[...] = (x_ref[...] * bm_scaled).astype(o_ref.dtype)


def _pick_tiles(C, HW, itemsize, budget):
    """Pick (c_t, hw_t) for kernel B's x/out tile.

    c_t is aligned to the dtype's sublane packing (8 f32 / 16 bf16 / 32 int8)
    unless it equals the full C. hw_t is the full (lane-dense) H*W row unless
    even a single aligned channel group exceeds the budget, in which case the
    flattened spatial axis is tiled in 128-lane multiples.
    """
    c_align = max(8, 32 // max(1, itemsize))
    if C * HW * itemsize <= budget:
        return C, HW
    c_t = (budget // (HW * itemsize)) // c_align * c_align
    if c_t >= c_align:
        return int(min(c_t, C)), HW
    # Small-C / huge-HW: tile the flattened spatial axis too.
    c_t = int(min(C, c_align))
    hw_t = (budget // (c_t * itemsize)) // 128 * 128
    hw_t = int(max(128, hw_t))
    hw_t = int(min(hw_t, pl.cdiv(HW, 128) * 128))
    return c_t, hw_t


# ----------------------------------------------------------------------------
# Wrapper
# ----------------------------------------------------------------------------
def dropblock2d(x, key, drop_prob, block_size, training=True):
    assert x.ndim == 4, "Expected (N, C, H, W)"
    if (not training) or drop_prob == 0.0:
        return x

    N, C, H, W = x.shape
    HW = H * W
    gamma = drop_prob / (block_size ** 2)
    cfg = _chip_config()

    # Glue: Bernoulli seed mask + zero pad (jax.random so the random stream is
    # bit-identical to the pure-JAX reference; the mask is tiny).
    # TODO(synk): RNG could move in-kernel via pltpu.prng_seed/prng_random_bits
    # (saves two small launches + one HBM round trip) but changes the stream.
    mask = (jax.random.uniform(key, (N, H, W)) < gamma).astype(jnp.float32)
    pad = block_size // 2
    padded = jnp.pad(mask, ((0, 0), (pad, pad), (pad, pad)))
    Hp, Wp = H + 2 * pad, W + 2 * pad

    # --- Kernel A: block-mask expansion, tiled over N, per-tile partial sums.
    n_t = _pick_n_tile(N, Hp, Wp)
    assert N % n_t == 0
    n_tiles = N // n_t

    bm, psums = pl.pallas_call(
        functools.partial(_blockmask_kernel, H=H, W=W, block_size=block_size),
        out_shape=(
            jax.ShapeDtypeStruct((N, H, W), cfg["bm_dtype"]),
            jax.ShapeDtypeStruct((n_tiles, 1, 1), jnp.float32),
        ),
        grid=(n_tiles,),
        in_specs=[pl.BlockSpec((n_t, Hp, Wp), lambda i: (i, 0, 0))],
        out_specs=(
            pl.BlockSpec((n_t, H, W), lambda i: (i, 0, 0)),
            pl.BlockSpec((1, 1, 1), lambda i: (i, 0, 0)),
        ),
        compiler_params=pltpu.CompilerParams(
            dimension_semantics=("parallel",),
            vmem_limit_bytes=cfg["vmem_limit"]),
    )(padded)

    # Tiny scalar glue: one division over n_tiles partial sums -> global scale.
    total = jnp.sum(psums)
    scale = (jnp.asarray(N * H * W, jnp.float32) / total).reshape(1, 1)

    # --- Kernel B: lane-dense (last dim = flattened H*W), channel-folded apply.
    # If HW is not a multiple of 128 some lane padding is accepted (review note).
    x2 = x.reshape(N, C, HW)
    bm3 = bm.reshape(N, 1, HW)
    c_t, hw_t = _pick_tiles(C, HW, x.dtype.itemsize, cfg["tile_budget"])
    n_c = pl.cdiv(C, c_t)
    n_hw = pl.cdiv(HW, hw_t)

    out2 = pl.pallas_call(
        _apply_kernel,
        out_shape=jax.ShapeDtypeStruct((N, C, HW), x.dtype),
        # C innermost: the bm block index is unchanged across c -> no re-DMA.
        grid=(N, n_hw, n_c),
        in_specs=[
            pl.BlockSpec((1, 1), lambda n, h, c: (0, 0)),               # scale
            pl.BlockSpec((1, c_t, hw_t), lambda n, h, c: (n, c, h)),    # x
            pl.BlockSpec((1, 1, hw_t), lambda n, h, c: (n, 0, h)),      # block mask
        ],
        out_specs=pl.BlockSpec((1, c_t, hw_t), lambda n, h, c: (n, c, h)),
        compiler_params=pltpu.CompilerParams(
            dimension_semantics=("parallel", "parallel", "parallel"),
            vmem_limit_bytes=cfg["vmem_limit"]),
    )(scale, x2, bm3)
    return out2.reshape(N, C, H, W)


# ----------------------------------------------------------------------------
# Pure-JAX reference (same RNG stream as the kernel path)
# ----------------------------------------------------------------------------
def _reference(x, key, drop_prob, block_size):
    N, C, H, W = x.shape
    gamma = drop_prob / (block_size ** 2)
    mask = (jax.random.uniform(key, (N, H, W)) < gamma).astype(jnp.float32)
    pad = block_size // 2
    pooled = lax.reduce_window(
        mask, -jnp.inf, lax.max,
        window_dimensions=(1, block_size, block_size),
        window_strides=(1, 1, 1),
        padding=((0, 0), (pad, pad), (pad, pad)),
    )
    if block_size % 2 == 0:
        pooled = pooled[:, :-1, :-1]
    bm = 1.0 - pooled
    out = x * bm[:, None, :, :]
    return out * bm.size / jnp.sum(bm)


if __name__ == "__main__":
    N, C, H, W = 2, 4, 16, 16
    drop_prob = 0.25

    key = jax.random.PRNGKey(0)
    kx, kmask = jax.random.split(key)
    x = jax.random.normal(kx, (N, C, H, W), dtype=jnp.float32)

    for block_size in (3, 4):  # odd and even block sizes
        out = jax.block_until_ready(
            dropblock2d(x, kmask, drop_prob, block_size, training=True))
        ref = jax.block_until_ready(_reference(x, kmask, drop_prob, block_size))
        assert out.shape == x.shape and out.dtype == x.dtype
        assert jnp.allclose(out, ref, rtol=1e-5, atol=1e-5), (
            f"mismatch vs reference (block_size={block_size})")

    print("KERNEL_OK")
</pallas_src>

<mosaic_0001>
module attributes {stable_mosaic.version = 11 : i64} {
  func.func @_blockmask_kernel(%arg0: i32, %arg1: memref<1x18x18xf32, #tpu.memory_space<vmem>>, %arg2: memref<1x16x16xf32, #tpu.memory_space<vmem>>, %arg3: memref<1x1x1xf32, #tpu.memory_space<vmem>>) attributes {dimension_semantics = [#tpu.dimension_semantics<parallel>], iteration_bounds = array<i64: 2>, scalar_prefetch = 0 : i64, scratch_operands = 0 : i64, tpu.core_type = #tpu.core_type<tc>, window_params = [{transform_indices = @transform_0, window_bounds = array<i64: 1, 18, 18>}, {transform_indices = @transform_1, window_bounds = array<i64: 1, 16, 16>}, {transform_indices = @transform_2, window_bounds = array<i64: 1, 1, 1>}]} {
    %c0 = arith.constant 0 : index
    %c0_0 = arith.constant 0 : index
    %c0_1 = arith.constant 0 : index
    %0 = vector.load %arg1[%c0, %c0_0, %c0_1] : memref<1x18x18xf32, #tpu.memory_space<vmem>>, vector<1x18x18xf32>
    %1 = vector.extract_strided_slice %0 {offsets = [0, 0, 0], sizes = [1, 18, 16], strides = [1, 1, 1]} : vector<1x18x18xf32> to vector<1x18x16xf32>
    %2 = vector.extract_strided_slice %0 {offsets = [0, 0, 1], sizes = [1, 18, 16], strides = [1, 1, 1]} : vector<1x18x18xf32> to vector<1x18x16xf32>
    %3 = arith.maximumf %1, %2 : vector<1x18x16xf32>
    %4 = vector.extract_strided_slice %0 {offsets = [0, 0, 2], sizes = [1, 18, 16], strides = [1, 1, 1]} : vector<1x18x18xf32> to vector<1x18x16xf32>
    %5 = arith.maximumf %3, %4 : vector<1x18x16xf32>
    %6 = vector.extract_strided_slice %5 {offsets = [0, 0, 0], sizes = [1, 16, 16], strides = [1, 1, 1]} : vector<1x18x16xf32> to vector<1x16x16xf32>
    %7 = vector.extract_strided_slice %5 {offsets = [0, 1, 0], sizes = [1, 16, 16], strides = [1, 1, 1]} : vector<1x18x16xf32> to vector<1x16x16xf32>
    %8 = arith.maximumf %6, %7 : vector<1x16x16xf32>
    %9 = vector.extract_strided_slice %5 {offsets = [0, 2, 0], sizes = [1, 16, 16], strides = [1, 1, 1]} : vector<1x18x16xf32> to vector<1x16x16xf32>
    %10 = arith.maximumf %8, %9 : vector<1x16x16xf32>
    %cst = arith.constant 1.000000e+00 : f32
    %11 = vector.broadcast %cst : f32 to vector<1x16x16xf32>
    %12 = arith.subf %11, %10 : vector<1x16x16xf32>
    %c0_2 = arith.constant 0 : index
    %c0_3 = arith.constant 0 : index
    %c0_4 = arith.constant 0 : index
    %13 = vector.load %arg2[%c0_2, %c0_3, %c0_4] : memref<1x16x16xf32, #tpu.memory_space<vmem>>, vector<1x16x16xf32>
    tpu.vector_store %arg2[%c0_2, %c0_3, %c0_4], %12 {strides = array<i32>} : memref<1x16x16xf32, #tpu.memory_space<vmem>>, vector<1x16x16xf32>,
    %14 = vector.shape_cast %12 : vector<1x16x16xf32> to vector<1x1x16x16xf32>
    %cst_5 = arith.constant dense<0.000000e+00> : vector<1xf32>
    %15 = vector.multi_reduction <add>, %14, %cst_5 [1, 2, 3] : vector<1x1x16x16xf32> to vector<1xf32>
    %16 = vector.shape_cast %15 : vector<1xf32> to vector<1x1x1x1xf32>
    %17 = vector.extract %16[0, 0, 0, 0] : f32 from vector<1x1x1x1xf32>
    %18 = vector.broadcast %17 : f32 to vector<1x1x1xf32>
    %c0_6 = arith.constant 0 : index
    %c0_7 = arith.constant 0 : index
    %c0_8 = arith.constant 0 : index
    %19 = vector.load %arg3[%c0_6, %c0_7, %c0_8] : memref<1x1x1xf32, #tpu.memory_space<vmem>>, vector<1x1x1xf32>
    tpu.vector_store %arg3[%c0_6, %c0_7, %c0_8], %18 {strides = array<i32>} : memref<1x1x1xf32, #tpu.memory_space<vmem>>, vector<1x1x1xf32>,
    return
  }
  func.func @transform_0(%arg0: i32) -> (i32, i32, i32) {
    %c0_i32 = arith.constant 0 : i32
    %c0_i32_0 = arith.constant 0 : i32
    %c0_i32_1 = arith.constant 0 : i32
    return %arg0, %c0_i32, %c0_i32_0 : i32, i32, i32
  }
  func.func @transform_1(%arg0: i32) -> (i32, i32, i32) {
    %c0_i32 = arith.constant 0 : i32
    %c0_i32_0 = arith.constant 0 : i32
    %c0_i32_1 = arith.constant 0 : i32
    return %arg0, %c0_i32, %c0_i32_0 : i32, i32, i32
  }
  func.func @transform_2(%arg0: i32) -> (i32, i32, i32) {
    %c0_i32 = arith.constant 0 : i32
    %c0_i32_0 = arith.constant 0 : i32
    %c0_i32_1 = arith.constant 0 : i32
    return %arg0, %c0_i32, %c0_i32_0 : i32, i32, i32
  }
}

</mosaic_0001>

<llo_original>
// kernel: tpu_custom_call.1
$region0: #{tpu_custom_call.1}
  #allocation0 [shape = 'u32[]', space=smem, size = 0x4, offset = 0x4, fixed_abs, tag = 'smem constant byte address 0x4 - core index']
  #allocation1 [shape = 'u32[144,128]{1,0:T(1,128)}', space=vmem, size = 0x12000, scoped, tag = 'internal scratch']
  %s0 = inlined_call_operand.vmem [shape: f32[2,18,18], index: 0, kind: input, shape index: {}]
  %s1 = inlined_call_operand.hbm [shape: f32[2,16,16], index: 1, kind: output, shape index: {0}]
  %s2 = inlined_call_operand.vmem [shape: f32[2,1,1], index: 2, kind: output, shape index: {1}]
  %3 = xla_tuple %s1, %s2
  %s4 = sld [smem:[#allocation0]]
  $region45: #{tpu_custom_call.1} parent=0
    _
  %s6 = ssub.s32 1, %s4
  %s7 = scalar_select 0, %s6, %s4
  $region1: #{tpu_custom_call.1} parent=0
    #allocation2 [shape = 'u8[16384]{0}', space=vmem, size = 0x4000, scoped, tag = 'output window, operand 0']
    #allocation3 [shape = 's32[2]{0}', space=sflag, size = 0x8, scoped, tag = 'scoped memory for tpu_custom_call.1']
    %8 = vsyncpa [#allocation3], 0
    %s9 = scalar_lea.sflag [#allocation3], 1
    %10 = vsyncpa %s9, 0
    loop: start=0, step=1, limit=4
    $region2: #{tpu_custom_call.1} parent=1 // loop_pre_header
      _
    $region3: #{tpu_custom_call.1} parent=1 // loop_header
      %s12 = sphi 0, %s16
      %p13 = scmp.ge.s32.totalorder %s12, 4
      %s22 = sphi 0, %s24
      %s25 = sphi 0, %s22
      %s26 = sphi 0, %s25
      %s42 = sphi 0, %s26
      %s48 = sphi 0, %s50
      %s51 = sphi 0, %s48
      %s52 = sphi 0, %s51
      %s68 = sphi 0, %s52
      %s74 = sphi 0, %s76
      %s77 = sphi 0, %s74
      %s78 = sphi 0, %s77
      %s94 = sphi 0, %s78
    $region4: #{tpu_custom_call.1} parent=1 // loop_header_branch
      %15 = sbr.rel (%p13) target = $region8
    $region5: #{tpu_custom_call.1} parent=1 // loop_body
      %s17 = ssub.s32 %s12, 1
      %s18 = ssub.s32 %s12, 2
      %s19 = sadd.s32 %s12, 1
      %s20 = ssub.s32 %s12, %s19
      %p21 = scmp.eq.s32.totalorder %s20, 0
      %s23 = sadd.s32 %s22, 1
      %s24 = scalar_select %p21, %s22, %s23
      %p27 = pneg %p21
      %p28 = scmp.eq.s32.totalorder %s12, 1
      %p29 = por %p27, %p28
      %p30 = scmp.ne.s32.totalorder %s22, %s25
      %p31 = scmp.eq.s32.totalorder %s12, 0
      %p32 = por %p30, %p31
      %p33 = scmp.ne.s32.totalorder %s22, %s25
      %p34 = scmp.eq.s32.totalorder %s17, 1
      %p35 = por %p33, %p34
      %p36 = scmp.ne.s32.totalorder %s25, %s26
      %p37 = scmp.eq.s32.totalorder %s17, 0
      %p38 = por %p36, %p37
      %p39 = scmp.ne.s32.totalorder %s25, %s26
      %p40 = scmp.eq.s32.totalorder %s18, 1
      %p41 = por %p39, %p40
      %p43 = scmp.ne.s32.totalorder %s26, %s42
      %p44 = scmp.eq.s32.totalorder %s18, 0
      %p45 = por %p43, %p44
      %s46 = ssub.s32 %s12, %s19
      %p47 = scmp.eq.s32.totalorder %s46, 0
      %s49 = sadd.s32 %s48, 1
      %s50 = scalar_select %p47, %s48, %s49
      %p53 = pneg %p47
      %p54 = scmp.eq.s32.totalorder %s12, 1
      %p55 = por %p53, %p54
      %p56 = scmp.ne.s32.totalorder %s48, %s51
      %p57 = scmp.eq.s32.totalorder %s12, 0
      %p58 = por %p56, %p57
      %p59 = scmp.ne.s32.totalorder %s48, %s51
      %p60 = scmp.eq.s32.totalorder %s17, 1
      %p61 = por %p59, %p60
      %p62 = scmp.ne.s32.totalorder %s51, %s52
      %p63 = scmp.eq.s32.totalorder %s17, 0
      %p64 = por %p62, %p63
      %p65 = scmp.ne.s32.totalorder %s51, %s52
      %p66 = scmp.eq.s32.totalorder %s18, 1
      %p67 = por %p65, %p66
      %p69 = scmp.ne.s32.totalorder %s52, %s68
      %p70 = scmp.eq.s32.totalorder %s18, 0
      %p71 = por %p69, %p70
      %s72 = ssub.s32 %s12, %s19
      %p73 = scmp.eq.s32.totalorder %s72, 0
      %s75 = sadd.s32 %s74, 1
      %s76 = scalar_select %p73, %s74, %s75
      %p79 = pneg %p73
      %p80 = scmp.eq.s32.totalorder %s12, 1
      %p81 = por %p79, %p80
      %p82 = scmp.ne.s32.totalorder %s74, %s77
      %p83 = scmp.eq.s32.totalorder %s12, 0
      %p84 = por %p82, %p83
      %p85 = scmp.ne.s32.totalorder %s74, %s77
      %p86 = scmp.eq.s32.totalorder %s17, 1
      %p87 = por %p85, %p86
      %p88 = scmp.ne.s32.totalorder %s77, %s78
      %p89 = scmp.eq.s32.totalorder %s17, 0
      %p90 = por %p88, %p89
      %p91 = scmp.ne.s32.totalorder %s77, %s78
      %p92 = scmp.eq.s32.totalorder %s18, 1
      %p93 = por %p91, %p92
      %p95 = scmp.ne.s32.totalorder %s78, %s94
      %p96 = scmp.eq.s32.totalorder %s18, 0
      %p97 = por %p95, %p96
      %p98 = scmp.le.s32.totalorder 1, %s12
      %p99 = scmp.lt.s32.totalorder %s12, 3
      %p100 = pnand %p98, %p99
      %p101 = pneg %p100
      // Predicated region
      $region9: #{tpu_custom_call.1} parent=5 // pred_check
        _
      $region10: #{tpu_custom_call.1} parent=5 // pred_check_branch
        %103 = sbr.rel (%p100) target = $region12
      $region11: #{tpu_custom_call.1} parent=5 // pred_region
        %s104 = ssub.s32 %s12, 1
      $region12: #{tpu_custom_call.1} parent=5 // pred_fallthru
        _
      %p105 = scmp.lt.s32.totalorder %s12, 2
      // Predicated region
      $region13: #{tpu_custom_call.1} parent=5 // pred_check
        %p106 = pneg %p105
      $region14: #{tpu_custom_call.1} parent=5 // pred_check_branch
        %108 = sbr.rel (%p106) target = $region16
      $region15: #{tpu_custom_call.1} parent=5 // pred_region
        // Predicated region
        $region17: #{tpu_custom_call.1} parent=15 // pred_check
          %p109 = pneg %p32
        $region18: #{tpu_custom_call.1} parent=15 // pred_check_branch
          %111 = sbr.rel (%p109) target = $region20
        $region19: #{tpu_custom_call.1} parent=15 // pred_region
          %p112 = scmp.lt.s32.totalorder %s12, 1
          %s113 = scalar_select %p112, %s12, 1
          %s114 = smul.addr %s113, 3
          %s115 = smul.addr %s114, 8
          %s116 = scalar_lea.vmem %s0, %s115
        $region20: #{tpu_custom_call.1} parent=15 // pred_fallthru
          _
      $region16: #{tpu_custom_call.1} parent=5 // pred_fallthru
        _
      %p117 = scmp.le.s32.totalorder 1, %s12
      %p118 = scmp.lt.s32.totalorder %s12, 3
      %p119 = pnand %p117, %p118
      %p120 = pneg %p119
      // Predicated region
      $region21: #{tpu_custom_call.1} parent=5 // pred_check
        _
      $region22: #{tpu_custom_call.1} parent=5 // pred_check_branch
        %122 = sbr.rel (%p119) target = $region24
      $region23: #{tpu_custom_call.1} parent=5 // pred_region
        %s123 = ssub.s32 %s12, 1
        %p124 = scmp.lt.s32.totalorder %s17, 1
        %s125 = scalar_select %p124, %s17, 1
        %s126 = smul.addr %s125, 3
        %s127 = smul.addr %s126, 8
        %s128 = scalar_lea.vmem %s0, %s127
        %p129 = pneg %p38
        %p130 = pneg %p35
        %p131 = pneg %p64
        %p132 = pneg %p61
        %s133 = sand.u32 %s51, 1
        %s134 = scalar_lea.sflag [#allocation3], %s133
        %s135 = sand.u32 %s51, 1
        %s136 = smul.addr %s135, 16
        %s137 = scalar_lea.vmem [#allocation2], %s136
        %p138 = pneg %p90
        %p139 = pneg %p87
        %p140 = scmp.lt.s32.totalorder %s17, 1
        %s141 = scalar_select %p140, %s17, 1
        %s142 = scalar_lea.vmem %s2, %s141
        %p143 = scmp.lt.s32.totalorder %s17, 1
        %s144 = scalar_select %p143, %s17, 1
        %s145 = smul.addr %s144, 3
        %s146 = smul.addr %s145, 8
        %s147 = scalar_lea.vmem %s0, %s146
        %p148 = scmp.lt.s32.totalorder %s17, 1
        %s149 = scalar_select %p148, %s17, 1
        %s150 = scalar_lea.vmem %s2, %s149
        %v151 = vld [vmem:[%s147] sm:$0xff]
        %v152 = vld [vmem:[%s147 + $0x8] sm:$0xff]
        %v153 = vld [vmem:[%s147 + $0x10] sm:$0x3]
        %157 = vrot.lane.b32.xlu0 %v151, 127
        %v158 = vpop.permute.xlu0 %157
        %159 = vrot.lane.b32.xlu0 %v152, 127
        %v160 = vpop.permute.xlu0 %159
        %161 = vrot.lane.b32.xlu0 %v153, 127
        %v162 = vpop.permute.xlu0 %161
        %v166 = vmax.f32 %v151, %v158
        %v167 = vmax.f32 %v152, %v160
        %v168 = vmax.f32 %v153, %v162
        %169 = vrot.lane.b32.xlu0 %v151, 126
        %v170 = vpop.permute.xlu0 %169
        %171 = vrot.lane.b32.xlu0 %v152, 126
        %v172 = vpop.permute.xlu0 %171
        %173 = vrot.lane.b32.xlu0 %v153, 126
        %v174 = vpop.permute.xlu0 %173
        %v178 = vmax.f32 %v166, %v170
        %v179 = vmax.f32 %v167, %v172
        %v180 = vmax.f32 %v168, %v174
        %vm184 = vcmask 1046528
        %v185 = vrot.slane %v178, 1
        %v186 = vrot.slane %v179, 1
        %v187 = vsel %vm184, %v185, %v186
        %v188 = vrot.slane %v180, 1
        %v189 = vsel %vm184, %v186, %v188
        %v192 = vmax.f32 %v178, %v187
        %v193 = vmax.f32 %v179, %v189
        %vm194 = vcmask 1045504
        %v195 = vrot.slane %v178, 2
        %v196 = vrot.slane %v179, 2
        %v197 = vsel %vm194, %v195, %v196
        %v198 = vrot.slane %v180, 2
        %v199 = vsel %vm194, %v196, %v198
        %v202 = vmax.f32 %v192, %v197
        %v203 = vmax.f32 %v193, %v199
        %v204 = vsub.f32 1.0, %v202
        %v205 = vsub.f32 1.0, %v203
        %vm206 = vcmask 130048
        %207 = vst.msk [vmem:[%s137] sm:$0xff] %vm206, %v204
        %208 = vst.msk [vmem:[%s137 + $0x8] sm:$0xff] %vm206, %v205
        %v209 = vsel %vm206, %v204, 0.0
        %v210 = vsel %vm206, %v205, 0.0
        %v211 = vadd.f32 %v209, %v210
        %212 = vadd.xlane.f32.xlu0 %v211
        %v213 = vpop.xlane.xlu0 %212
        %v214 = vrot.slane %v213, 4
        %v215 = vadd.f32 %v213, %v214
        %v216 = vrot.slane %v215, 2
        %v217 = vadd.f32 %v215, %v216
        %v218 = vrot.slane %v217, 1
        %v219 = vadd.f32 %v217, %v218
        %s220 = vtos %v219
        %v221 = vstv %s220
        %vm222 = vcmask 0
        %223 = vst.msk [vmem:[%s150] sm:$0x1] %vm222, %v221
        %s224 = sand.u32 %s51, 1
        %s225 = scalar_lea.sflag [#allocation3], %s224
        %s226 = sand.u32 %s51, 1
        %s227 = smul.addr %s226, 16
        %s228 = scalar_lea.vmem [#allocation2], %s227
        %p229 = scmp.lt.s32.totalorder %s17, 1
        %s230 = scalar_select %p229, %s17, 1
        %s231 = scalar_lea.vmem %s2, %s230
        // Predicated region
        $region25: #{tpu_custom_call.1} parent=23 // pred_check
          %p232 = pneg %p61
        $region26: #{tpu_custom_call.1} parent=23 // pred_check_branch
          %234 = sbr.rel (%p232) target = $region28
        $region27: #{tpu_custom_call.1} parent=23 // pred_region
          %s236 = ssub.s32 256, 256
          %237 = vsyncadd %s225, %s236
          %s238 = smul.addr %s17, 2
          %s239 = smul.addr %s238, 128
          %s240 = scalar_lea.hbm %s1, %s239
          %s241 = sshll.u32 %s228, 4
          %s242 = int_to_ptr.vmem [resolvable:$true] %s241
          %247 = dma.vmem_to_hbm [thread:$0]  %s242, 256, %s240, %s225, 128, 128, 8
        $region28: #{tpu_custom_call.1} parent=23 // pred_fallthru
          _
        // Predicated region
        $region29: #{tpu_custom_call.1} parent=23 // pred_check
          %p248 = pneg %p87
        $region30: #{tpu_custom_call.1} parent=23 // pred_check_branch
          %250 = sbr.rel (%p248) target = $region32
        $region31: #{tpu_custom_call.1} parent=23 // pred_region
          _
        $region32: #{tpu_custom_call.1} parent=23 // pred_fallthru
          _
      $region24: #{tpu_custom_call.1} parent=5 // pred_fallthru
        _
      %p251 = scmp.le.s32.totalorder 2, %s12
      // Predicated region
      $region33: #{tpu_custom_call.1} parent=5 // pred_check
        %p252 = pneg %p251
      $region34: #{tpu_custom_call.1} parent=5 // pred_check_branch
        %254 = sbr.rel (%p252) target = $region36
      $region35: #{tpu_custom_call.1} parent=5 // pred_region
        %s255 = ssub.s32 %s12, 2
        // Predicated region
        $region37: #{tpu_custom_call.1} parent=35 // pred_check
          %p256 = pneg %p67
        $region38: #{tpu_custom_call.1} parent=35 // pred_check_branch
          %258 = sbr.rel (%p256) target = $region40
        $region39: #{tpu_custom_call.1} parent=35 // pred_region
          %s259 = sand.u32 %s52, 1
          %s260 = scalar_lea.sflag [#allocation3], %s259
          %s261 = sand.u32 %s52, 1
          %s262 = smul.addr %s261, 16
          %s263 = scalar_lea.vmem [#allocation2], %s262
          %264 = dma.done %s260, 256
        $region40: #{tpu_custom_call.1} parent=35 // pred_fallthru
          _
        // Predicated region
        $region41: #{tpu_custom_call.1} parent=35 // pred_check
          %p265 = pneg %p93
        $region42: #{tpu_custom_call.1} parent=35 // pred_check_branch
          %267 = sbr.rel (%p265) target = $region44
        $region43: #{tpu_custom_call.1} parent=35 // pred_region
          %p268 = scmp.lt.s32.totalorder %s18, 1
          %s269 = scalar_select %p268, %s18, 1
          %s270 = scalar_lea.vmem %s2, %s269
        $region44: #{tpu_custom_call.1} parent=35 // pred_fallthru
          _
      $region36: #{tpu_custom_call.1} parent=5 // pred_fallthru
        _
    $region6: #{tpu_custom_call.1} parent=1 // loop_footer
      %s16 = sadd.s32 1, %s12
    $region7: #{tpu_custom_call.1} parent=1 // loop_footer_branch
      %11 = sbr.rel target = $region3
    $region8: #{tpu_custom_call.1} parent=1 // loop_exit
      _
    %271 = vsyncpa [#allocation3], 1
    %s272 = scalar_lea.sflag [#allocation3], 1
    %273 = vsyncpa %s272, 1

</llo_original>
